<compile_context>
chip_gen: v7x
topology: tpu7x:2x2x1
jax: 0.10.0
libtpu: 0.0.40
codegen_flags: <defaults>
</compile_context>

<pallas_src>
import jax
import jax.numpy as jnp
import numpy as np
from jax.experimental import pallas as pl
from jax.experimental.pallas import tpu as pltpu

# ---- model hyper-parameters (small, consistent with the module) ----
EMBED = 32
HEADS = 4
HEAD_DIM = EMBED // HEADS
FWD_EXP = 4
HIDDEN = FWD_EXP * EMBED
SEQ = 8
BATCH = 2
LN_EPS = 1e-5
SCALE = 1.0 / (EMBED ** 0.5)   # softmax(energy / sqrt(embed_size))


def _layer_norm(x, gamma, beta):
    # x: (R, E); gamma/beta: (1, E). Biased variance, matching nn.LayerNorm.
    mean = jnp.mean(x, axis=-1, keepdims=True)
    var = jnp.mean((x - mean) ** 2, axis=-1, keepdims=True)
    inv = jax.lax.rsqrt(var + LN_EPS)
    return (x - mean) * inv * gamma + beta


def transformer_block_kernel(
    slab_ref, mask_ref, q2d_ref,
    wqkv_ref, wo_ref, vecs_ref, w1_ref, bf1_ref, w2_ref,
    o_ref,
):
    # slab : (H*R, 3*hd + (H-3)*... ) = (64, 48)  [q_h | k_h | v_expand]
    # mask : (H*R, H*R) additive (0 or -1e20); encodes causal + cross-batch
    #        + cross-head separation
    # q2d  : (R, E) original query rows (residual path)
    R, E = q2d_ref.shape
    hd = HEAD_DIM

    # ---- fused Q/K/V projection: one matmul, static lane slices ----
    proj = jnp.dot(slab_ref[...], wqkv_ref[...],
                   preferred_element_type=jnp.float32)            # (H*R, 48)
    qp = proj[:, 0:hd]                                            # (H*R, hd), pre-scaled
    kp = proj[:, hd:2 * hd]                                       # (H*R, hd)
    vpx = proj[:, 2 * hd:]                                        # (H*R, E), head-block lanes

    # ---- all heads & batches in a single masked score matrix ----
    energy = jnp.einsum("qd,kd->qk", qp, kp,
                        preferred_element_type=jnp.float32)       # (H*R, H*R)
    energy = energy + mask_ref[...]

    m = jnp.max(energy, axis=-1, keepdims=True)
    p = jnp.exp(energy - m)
    denom = jnp.sum(p, axis=-1, keepdims=True)
    attn = p * pl.reciprocal(denom, approx=True)

    # ---- single context matmul; head h lands in lane block h of row block h
    z = jnp.dot(attn, vpx, preferred_element_type=jnp.float32)    # (H*R, E)
    ctx = z[0:R, :]
    for h in range(1, HEADS):
        ctx = ctx + z[h * R:(h + 1) * R, :]                       # (R, E)

    # ---- packed parameter vectors ----
    vecs = vecs_ref[...]
    bo, g1, be1 = vecs[0:1, :], vecs[1:2, :], vecs[2:3, :]
    bf2, g2, be2 = vecs[3:4, :], vecs[4:5, :], vecs[5:6, :]

    # ---- fc_out (one matmul) + residual + norm1 (dropout = identity) ----
    att = jnp.dot(ctx, wo_ref[...], preferred_element_type=jnp.float32) + bo
    x = _layer_norm(att + q2d_ref[...], g1, be1)

    # ---- feed-forward: Linear(E, HIDDEN) -> ReLU -> Linear(HIDDEN, E) ----
    h1 = jnp.dot(x, w1_ref[...], preferred_element_type=jnp.float32) + bf1_ref[...]
    h1 = jnp.maximum(h1, 0.0)
    ff = jnp.dot(h1, w2_ref[...], preferred_element_type=jnp.float32) + bf2

    # ---- residual + norm2 ----
    o_ref[...] = _layer_norm(ff + x, g2, be2)


def transformer_block(value, key, query, mask, params):
    N, L, E = query.shape
    R = N * L
    HR = HEADS * R
    (wv, wk, wq, wo, bo, g1, be1, w1, bf1, w2, bf2, g2, be2) = params

    # -------- wrapper-side layout plumbing (cheap XLA ops on small consts) ---
    def to_heads(x):
        # (N, L, E) -> head-major row slab (H*N*L, hd)
        return (x.reshape(N, L, HEADS, HEAD_DIM)
                 .transpose(2, 0, 1, 3)
                 .reshape(HR, HEAD_DIM))

    q_h = to_heads(query)
    k_h = to_heads(key)
    v_h = to_heads(value)
    q2d = query.reshape(R, E)

    # v slab expanded to E lanes: row of head h carries its values in lane
    # block h, so one attention matmul directly yields the (R, E) context
    # after summing head row-blocks.
    head_of_row = jnp.arange(HR) // R
    v_expand = (jax.nn.one_hot(head_of_row, HEADS, dtype=jnp.float32)[:, :, None]
                * v_h[:, None, :]).reshape(HR, E)                   # (HR, E)

    slab = jnp.concatenate([q_h, k_h, v_expand], axis=-1)           # (HR, 48)

    # Fused block-diagonal QKV weight; softmax scale folded into the Q block.
    z88 = jnp.zeros((HEAD_DIM, HEAD_DIM), jnp.float32)
    z8E = jnp.zeros((HEAD_DIM, E), jnp.float32)
    zE8 = jnp.zeros((E, HEAD_DIM), jnp.float32)
    wv_block = jnp.kron(jnp.eye(HEADS, dtype=jnp.float32), wv.T)    # (E, E)
    w_qkv = jnp.block([
        [wq.T * jnp.float32(SCALE), z88, z8E],
        [z88, wk.T, z8E],
        [zE8, zE8, wv_block],
    ])                                                              # (48, 48)

    # (HR, HR) additive mask: 0 where attention allowed, -1e20 elsewhere
    # (user mask AND same-batch AND same-head).
    rows = jnp.arange(HR)
    head_of = rows // R
    batch_of = (rows % R) // L
    pos_of = rows % L
    mask_nll = mask[:, 0].astype(jnp.float32)                       # (N, L, L); 1 = masked
    user_masked = mask_nll[batch_of[:, None], pos_of[:, None], pos_of[None, :]]
    allowed = ((head_of[:, None] == head_of[None, :])
               & (batch_of[:, None] == batch_of[None, :])
               & (user_masked == 0.0))
    add_mask = jnp.where(allowed, jnp.float32(0.0), jnp.float32(-1e20))

    # Pack the six (1, E) parameter vectors into one (8, E) operand.
    vecs = jnp.concatenate(
        [bo, g1, be1, bf2, g2, be2, jnp.zeros((2, E), jnp.float32)], axis=0)

    inputs = (slab, add_mask, q2d,
              w_qkv, wo.T, vecs, w1.T, bf1, w2.T)

    vmem = pltpu.MemorySpace.VMEM
    out2d = pl.pallas_call(
        transformer_block_kernel,
        out_shape=jax.ShapeDtypeStruct((R, E), jnp.float32),
        in_specs=[pl.BlockSpec(memory_space=vmem)] * len(inputs),
        out_specs=pl.BlockSpec(memory_space=vmem),
    )(*inputs)

    return out2d.reshape(N, L, E)


# ---------------- pure-JAX reference (mirrors the PyTorch forward) ----------
def reference_forward(value, key, query, mask, params):
    (wv, wk, wq, wo, bo, g1, be1, w1, bf1, w2, bf2, g2, be2) = params
    N, L, E = query.shape

    def split_heads(x):
        return x.reshape(N, L, HEADS, HEAD_DIM)

    v = split_heads(value) @ wv.T
    q = split_heads(query) @ wq.T
    k = split_heads(key) @ wk.T
    energy = jnp.einsum("nqhd,nkhd->nhqk", q, k)
    energy = jnp.where(mask[:, :, :, :] == 1.0, -1e20, energy)
    attn = jax.nn.softmax(energy / jnp.sqrt(jnp.float32(E)), axis=3)
    out = jnp.einsum("nhql,nlhd->nqhd", attn, v).reshape(N, L, E)
    attention = out @ wo.T + bo[0]

    def ln(x, g, b):
        mean = jnp.mean(x, axis=-1, keepdims=True)
        var = jnp.mean((x - mean) ** 2, axis=-1, keepdims=True)
        return (x - mean) / jnp.sqrt(var + LN_EPS) * g[0] + b[0]

    x = ln(attention + query, g1, be1)
    ff = jnp.maximum(x @ w1.T + bf1[0], 0.0) @ w2.T + bf2[0]
    return ln(ff + x, g2, be2)


def make_params(rng):
    keys = jax.random.split(rng, 8)
    s = 0.1
    wv = jax.random.normal(keys[0], (HEAD_DIM, HEAD_DIM), jnp.float32) * s
    wk = jax.random.normal(keys[1], (HEAD_DIM, HEAD_DIM), jnp.float32) * s
    wq = jax.random.normal(keys[2], (HEAD_DIM, HEAD_DIM), jnp.float32) * s
    wo = jax.random.normal(keys[3], (EMBED, EMBED), jnp.float32) * s
    bo = jax.random.normal(keys[4], (1, EMBED), jnp.float32) * s
    g1 = jnp.ones((1, EMBED), jnp.float32)
    be1 = jnp.zeros((1, EMBED), jnp.float32)
    w1 = jax.random.normal(keys[5], (HIDDEN, EMBED), jnp.float32) * s
    bf1 = jax.random.normal(keys[6], (1, HIDDEN), jnp.float32) * s
    w2 = jax.random.normal(keys[7], (EMBED, HIDDEN), jnp.float32) * s
    bf2 = jnp.zeros((1, EMBED), jnp.float32)
    g2 = jnp.ones((1, EMBED), jnp.float32)
    be2 = jnp.zeros((1, EMBED), jnp.float32)
    return (wv, wk, wq, wo, bo, g1, be1, w1, bf1, w2, bf2, g2, be2)


if __name__ == "__main__":
    root = jax.random.PRNGKey(0)
    k_v, k_k, k_q, k_p = jax.random.split(root, 4)

    value = jax.random.normal(k_v, (BATCH, SEQ, EMBED), jnp.float32)
    key = jax.random.normal(k_k, (BATCH, SEQ, EMBED), jnp.float32)
    query = jax.random.normal(k_q, (BATCH, SEQ, EMBED), jnp.float32)

    # causal-style mask: 1.0 means "masked" (matches masked_fill(mask == 1, -1e20))
    causal = jnp.triu(jnp.ones((SEQ, SEQ), jnp.float32), k=1)
    mask = jnp.broadcast_to(causal, (BATCH, 1, SEQ, SEQ))

    params = make_params(k_p)

    out = transformer_block(value, key, query, mask, params)
    out = jax.block_until_ready(out)

    ref = reference_forward(value, key, query, mask, params)
    # Tolerance 2e-3 accommodates the EUP approximate reciprocal in the
    # softmax denominator; everything else is exact f32.
    np.testing.assert_allclose(np.asarray(out), np.asarray(ref), rtol=2e-3, atol=2e-3)

    print("KERNEL_OK")
</pallas_src>

<mosaic_0001>
module attributes {stable_mosaic.version = 11 : i64} {
  func.func @transformer_block_kernel(%arg0: memref<64x48xf32, #tpu.memory_space<vmem>>, %arg1: memref<64x64xf32, #tpu.memory_space<vmem>>, %arg2: memref<16x32xf32, #tpu.memory_space<vmem>>, %arg3: memref<48x48xf32, #tpu.memory_space<vmem>>, %arg4: memref<32x32xf32, #tpu.memory_space<vmem>>, %arg5: memref<8x32xf32, #tpu.memory_space<vmem>>, %arg6: memref<32x128xf32, #tpu.memory_space<vmem>>, %arg7: memref<1x128xf32, #tpu.memory_space<vmem>>, %arg8: memref<128x32xf32, #tpu.memory_space<vmem>>, %arg9: memref<16x32xf32, #tpu.memory_space<vmem>>) attributes {dimension_semantics = [], scalar_prefetch = 0 : i64, scratch_operands = 0 : i64, tpu.core_type = #tpu.core_type<tc>} {
    %c0 = arith.constant 0 : index
    %c0_0 = arith.constant 0 : index
    %0 = vector.load %arg0[%c0, %c0_0] : memref<64x48xf32, #tpu.memory_space<vmem>>, vector<64x48xf32>
    %c0_1 = arith.constant 0 : index
    %c0_2 = arith.constant 0 : index
    %1 = vector.load %arg3[%c0_1, %c0_2] : memref<48x48xf32, #tpu.memory_space<vmem>>, vector<48x48xf32>
    %cst = arith.constant dense<0.000000e+00> : vector<64x48xf32>
    %2 = tpu.matmul %0, %1, %cst {dimension_numbers = #tpu.dot_dimension_numbers<[1], [0], [0], [1], [0, 0, 1, 1], [], []>} : vector<64x48xf32>, vector<48x48xf32>, vector<64x48xf32> -> vector<64x48xf32>
    %3 = vector.extract_strided_slice %2 {offsets = [0, 0], sizes = [64, 8], strides = [1, 1]} : vector<64x48xf32> to vector<64x8xf32>
    %4 = vector.extract_strided_slice %2 {offsets = [0, 8], sizes = [64, 8], strides = [1, 1]} : vector<64x48xf32> to vector<64x8xf32>
    %5 = vector.extract_strided_slice %2 {offsets = [0, 16], sizes = [64, 32], strides = [1, 1]} : vector<64x48xf32> to vector<64x32xf32>
    "tpu.trace_start"() <{level = 10 : i32, message = "qd,kd->qk"}> : () -> ()
    %cst_3 = arith.constant dense<0.000000e+00> : vector<64x64xf32>
    %6 = tpu.matmul %3, %4, %cst_3 {dimension_numbers = #tpu.dot_dimension_numbers<[1], [1], [0], [0], [0, 0, 1, 0], [], []>} : vector<64x8xf32>, vector<64x8xf32>, vector<64x64xf32> -> vector<64x64xf32>
    "tpu.trace_stop"() : () -> ()
    %c0_4 = arith.constant 0 : index
    %c0_5 = arith.constant 0 : index
    %7 = vector.load %arg1[%c0_4, %c0_5] : memref<64x64xf32, #tpu.memory_space<vmem>>, vector<64x64xf32>
    %8 = arith.addf %6, %7 : vector<64x64xf32>
    %cst_6 = arith.constant dense<0xFF800000> : vector<64xf32>
    %9 = vector.multi_reduction <maximumf>, %8, %cst_6 [1] : vector<64x64xf32> to vector<64xf32>
    %10 = vector.shape_cast %9 : vector<64xf32> to vector<64x1xf32>
    %11 = vector.broadcast %10 : vector<64x1xf32> to vector<64x64xf32>
    %12 = arith.subf %8, %11 : vector<64x64xf32>
    %13 = math.exp %12 : vector<64x64xf32>
    %cst_7 = arith.constant dense<0.000000e+00> : vector<64xf32>
    %14 = vector.multi_reduction <add>, %13, %cst_7 [1] : vector<64x64xf32> to vector<64xf32>
    %15 = vector.shape_cast %14 : vector<64xf32> to vector<64x1xf32>
    %16 = tpu.reciprocal %15 {approx = true} : vector<64x1xf32> -> vector<64x1xf32>
    %17 = vector.broadcast %16 : vector<64x1xf32> to vector<64x64xf32>
    %18 = arith.mulf %13, %17 : vector<64x64xf32>
    %cst_8 = arith.constant dense<0.000000e+00> : vector<64x32xf32>
    %19 = tpu.matmul %18, %5, %cst_8 {dimension_numbers = #tpu.dot_dimension_numbers<[1], [0], [0], [1], [0, 0, 1, 1], [], []>} : vector<64x64xf32>, vector<64x32xf32>, vector<64x32xf32> -> vector<64x32xf32>
    %20 = vector.extract_strided_slice %19 {offsets = [0, 0], sizes = [16, 32], strides = [1, 1]} : vector<64x32xf32> to vector<16x32xf32>
    %21 = vector.extract_strided_slice %19 {offsets = [16, 0], sizes = [16, 32], strides = [1, 1]} : vector<64x32xf32> to vector<16x32xf32>
    %22 = arith.addf %20, %21 : vector<16x32xf32>
    %23 = vector.extract_strided_slice %19 {offsets = [32, 0], sizes = [16, 32], strides = [1, 1]} : vector<64x32xf32> to vector<16x32xf32>
    %24 = arith.addf %22, %23 : vector<16x32xf32>
    %25 = vector.extract_strided_slice %19 {offsets = [48, 0], sizes = [16, 32], strides = [1, 1]} : vector<64x32xf32> to vector<16x32xf32>
    %26 = arith.addf %24, %25 : vector<16x32xf32>
    %c0_9 = arith.constant 0 : index
    %c0_10 = arith.constant 0 : index
    %27 = vector.load %arg5[%c0_9, %c0_10] : memref<8x32xf32, #tpu.memory_space<vmem>>, vector<8x32xf32>
    %28 = vector.extract_strided_slice %27 {offsets = [0, 0], sizes = [1, 32], strides = [1, 1]} : vector<8x32xf32> to vector<1x32xf32>
    %29 = vector.extract_strided_slice %27 {offsets = [1, 0], sizes = [1, 32], strides = [1, 1]} : vector<8x32xf32> to vector<1x32xf32>
    %30 = vector.extract_strided_slice %27 {offsets = [2, 0], sizes = [1, 32], strides = [1, 1]} : vector<8x32xf32> to vector<1x32xf32>
    %31 = vector.extract_strided_slice %27 {offsets = [3, 0], sizes = [1, 32], strides = [1, 1]} : vector<8x32xf32> to vector<1x32xf32>
    %32 = vector.extract_strided_slice %27 {offsets = [4, 0], sizes = [1, 32], strides = [1, 1]} : vector<8x32xf32> to vector<1x32xf32>
    %33 = vector.extract_strided_slice %27 {offsets = [5, 0], sizes = [1, 32], strides = [1, 1]} : vector<8x32xf32> to vector<1x32xf32>
    %c0_11 = arith.constant 0 : index
    %c0_12 = arith.constant 0 : index
    %34 = vector.load %arg4[%c0_11, %c0_12] : memref<32x32xf32, #tpu.memory_space<vmem>>, vector<32x32xf32>
    %cst_13 = arith.constant dense<0.000000e+00> : vector<16x32xf32>
    %35 = tpu.matmul %26, %34, %cst_13 {dimension_numbers = #tpu.dot_dimension_numbers<[1], [0], [0], [1], [0, 0, 1, 1], [], []>} : vector<16x32xf32>, vector<32x32xf32>, vector<16x32xf32> -> vector<16x32xf32>
    %36 = vector.broadcast %28 : vector<1x32xf32> to vector<16x32xf32>
    %37 = arith.addf %35, %36 : vector<16x32xf32>
    %c0_14 = arith.constant 0 : index
    %c0_15 = arith.constant 0 : index
    %38 = vector.load %arg2[%c0_14, %c0_15] : memref<16x32xf32, #tpu.memory_space<vmem>>, vector<16x32xf32>
    %39 = arith.addf %37, %38 : vector<16x32xf32>
    %cst_16 = arith.constant dense<0.000000e+00> : vector<16xf32>
    %40 = vector.multi_reduction <add>, %39, %cst_16 [1] : vector<16x32xf32> to vector<16xf32>
    %41 = vector.shape_cast %40 : vector<16xf32> to vector<16x1xf32>
    %cst_17 = arith.constant 3.200000e+01 : f32
    %42 = vector.broadcast %cst_17 : f32 to vector<16x1xf32>
    %43 = arith.divf %41, %42 : vector<16x1xf32>
    %44 = vector.broadcast %43 : vector<16x1xf32> to vector<16x32xf32>
    %45 = arith.subf %39, %44 : vector<16x32xf32>
    %46 = arith.mulf %45, %45 : vector<16x32xf32>
    %cst_18 = arith.constant dense<0.000000e+00> : vector<16xf32>
    %47 = vector.multi_reduction <add>, %46, %cst_18 [1] : vector<16x32xf32> to vector<16xf32>
    %48 = vector.shape_cast %47 : vector<16xf32> to vector<16x1xf32>
    %cst_19 = arith.constant 3.200000e+01 : f32
    %49 = vector.broadcast %cst_19 : f32 to vector<16x1xf32>
    %50 = arith.divf %48, %49 : vector<16x1xf32>
    %cst_20 = arith.constant 9.99999974E-6 : f32
    %51 = vector.broadcast %cst_20 : f32 to vector<16x1xf32>
    %52 = arith.addf %50, %51 : vector<16x1xf32>
    %53 = math.rsqrt %52 : vector<16x1xf32>
    %54 = vector.broadcast %43 : vector<16x1xf32> to vector<16x32xf32>
    %55 = arith.subf %39, %54 : vector<16x32xf32>
    %56 = vector.broadcast %53 : vector<16x1xf32> to vector<16x32xf32>
    %57 = arith.mulf %55, %56 : vector<16x32xf32>
    %58 = vector.broadcast %29 : vector<1x32xf32> to vector<16x32xf32>
    %59 = arith.mulf %57, %58 : vector<16x32xf32>
    %60 = vector.broadcast %30 : vector<1x32xf32> to vector<16x32xf32>
    %61 = arith.addf %59, %60 : vector<16x32xf32>
    %c0_21 = arith.constant 0 : index
    %c0_22 = arith.constant 0 : index
    %62 = vector.load %arg6[%c0_21, %c0_22] : memref<32x128xf32, #tpu.memory_space<vmem>>, vector<32x128xf32>
    %cst_23 = arith.constant dense<0.000000e+00> : vector<16x128xf32>
    %63 = tpu.matmul %61, %62, %cst_23 {dimension_numbers = #tpu.dot_dimension_numbers<[1], [0], [0], [1], [0, 0, 1, 1], [], []>} : vector<16x32xf32>, vector<32x128xf32>, vector<16x128xf32> -> vector<16x128xf32>
    %c0_24 = arith.constant 0 : index
    %c0_25 = arith.constant 0 : index
    %64 = vector.load %arg7[%c0_24, %c0_25] : memref<1x128xf32, #tpu.memory_space<vmem>>, vector<1x128xf32>
    %65 = vector.broadcast %64 : vector<1x128xf32> to vector<16x128xf32>
    %66 = arith.addf %63, %65 : vector<16x128xf32>
    %cst_26 = arith.constant 0.000000e+00 : f32
    %67 = vector.broadcast %cst_26 : f32 to vector<16x128xf32>
    %68 = arith.maximumf %66, %67 : vector<16x128xf32>
    %c0_27 = arith.constant 0 : index
    %c0_28 = arith.constant 0 : index
    %69 = vector.load %arg8[%c0_27, %c0_28] : memref<128x32xf32, #tpu.memory_space<vmem>>, vector<128x32xf32>
    %cst_29 = arith.constant dense<0.000000e+00> : vector<16x32xf32>
    %70 = tpu.matmul %68, %69, %cst_29 {dimension_numbers = #tpu.dot_dimension_numbers<[1], [0], [0], [1], [0, 0, 1, 1], [], []>} : vector<16x128xf32>, vector<128x32xf32>, vector<16x32xf32> -> vector<16x32xf32>
    %71 = vector.broadcast %31 : vector<1x32xf32> to vector<16x32xf32>
    %72 = arith.addf %70, %71 : vector<16x32xf32>
    %73 = arith.addf %72, %61 : vector<16x32xf32>
    %cst_30 = arith.constant dense<0.000000e+00> : vector<16xf32>
    %74 = vector.multi_reduction <add>, %73, %cst_30 [1] : vector<16x32xf32> to vector<16xf32>
    %75 = vector.shape_cast %74 : vector<16xf32> to vector<16x1xf32>
    %cst_31 = arith.constant 3.200000e+01 : f32
    %76 = vector.broadcast %cst_31 : f32 to vector<16x1xf32>
    %77 = arith.divf %75, %76 : vector<16x1xf32>
    %78 = vector.broadcast %77 : vector<16x1xf32> to vector<16x32xf32>
    %79 = arith.subf %73, %78 : vector<16x32xf32>
    %80 = arith.mulf %79, %79 : vector<16x32xf32>
    %cst_32 = arith.constant dense<0.000000e+00> : vector<16xf32>
    %81 = vector.multi_reduction <add>, %80, %cst_32 [1] : vector<16x32xf32> to vector<16xf32>
    %82 = vector.shape_cast %81 : vector<16xf32> to vector<16x1xf32>
    %cst_33 = arith.constant 3.200000e+01 : f32
    %83 = vector.broadcast %cst_33 : f32 to vector<16x1xf32>
    %84 = arith.divf %82, %83 : vector<16x1xf32>
    %cst_34 = arith.constant 9.99999974E-6 : f32
    %85 = vector.broadcast %cst_34 : f32 to vector<16x1xf32>
    %86 = arith.addf %84, %85 : vector<16x1xf32>
    %87 = math.rsqrt %86 : vector<16x1xf32>
    %88 = vector.broadcast %77 : vector<16x1xf32> to vector<16x32xf32>
    %89 = arith.subf %73, %88 : vector<16x32xf32>
    %90 = vector.broadcast %87 : vector<16x1xf32> to vector<16x32xf32>
    %91 = arith.mulf %89, %90 : vector<16x32xf32>
    %92 = vector.broadcast %32 : vector<1x32xf32> to vector<16x32xf32>
    %93 = arith.mulf %91, %92 : vector<16x32xf32>
    %94 = vector.broadcast %33 : vector<1x32xf32> to vector<16x32xf32>
    %95 = arith.addf %93, %94 : vector<16x32xf32>
    %c0_35 = arith.constant 0 : index
    %c0_36 = arith.constant 0 : index
    %96 = vector.load %arg9[%c0_35, %c0_36] : memref<16x32xf32, #tpu.memory_space<vmem>>, vector<16x32xf32>
    tpu.vector_store %arg9[%c0_35, %c0_36], %95 {strides = array<i32>} : memref<16x32xf32, #tpu.memory_space<vmem>>, vector<16x32xf32>,
    return
  }
}

</mosaic_0001>

<llo_original>
// kernel: tpu_custom_call.1
$region0: #{tpu_custom_call.1}
  #allocation0 [shape = 'u32[]', space=smem, size = 0x4, offset = 0x4, fixed_abs, tag = 'smem constant byte address 0x4 - core index']
  #allocation1 [shape = 'u32[144,128]{1,0:T(1,128)}', space=vmem, size = 0x12000, scoped, tag = 'internal scratch']
  %s0 = inlined_call_operand.vmem [shape: f32[64,48], index: 0, kind: input, shape index: {}]
  %s1 = inlined_call_operand.vmem [shape: f32[64,64], index: 1, kind: input, shape index: {}]
  %s2 = inlined_call_operand.vmem [shape: f32[16,32], index: 2, kind: input, shape index: {}]
  %s3 = inlined_call_operand.vmem [shape: f32[48,48], index: 3, kind: input, shape index: {}]
  %s4 = inlined_call_operand.vmem [shape: f32[32,32], index: 4, kind: input, shape index: {}]
  %s5 = inlined_call_operand.vmem [shape: f32[8,32], index: 5, kind: input, shape index: {}]
  %s6 = inlined_call_operand.vmem [shape: f32[32,128], index: 6, kind: input, shape index: {}]
  %s7 = inlined_call_operand.vmem [shape: f32[1,128], index: 7, kind: input, shape index: {}]
  %s8 = inlined_call_operand.vmem [shape: f32[128,32], index: 8, kind: input, shape index: {}]
  %s9 = inlined_call_operand.hbm [shape: f32[16,32], index: 9, kind: output, shape index: {}]
  %s10 = sld [smem:[#allocation0]]
  $region46: #{tpu_custom_call.1} parent=0
    _
  %s12 = ssub.s32 1, %s10
  %s13 = scalar_select 0, %s12, %s10
  $region1: #{tpu_custom_call.1} parent=0
    #allocation2 [shape = 'u8[8192]{0}', space=vmem, size = 0x2000, scoped, tag = 'output window, operand 0, single buffered']
    #allocation3 [shape = 's32[1]{0}', space=sflag, size = 0x4, scoped, tag = 'scoped memory for tpu_custom_call.1']
    %14 = vsyncpa [#allocation3], 0
    // Predicated region
    $region2: #{tpu_custom_call.1} parent=1 // pred_check
      _
    $region3: #{tpu_custom_call.1} parent=1 // pred_check_branch
      %16 = sbr.rel (0) target = $region5
    $region4: #{tpu_custom_call.1} parent=1 // pred_region
      _
    $region5: #{tpu_custom_call.1} parent=1 // pred_fallthru
      _
    // Predicated region
    $region6: #{tpu_custom_call.1} parent=1 // pred_check
      _
    $region7: #{tpu_custom_call.1} parent=1 // pred_check_branch
      %18 = sbr.rel (0) target = $region9
    $region8: #{tpu_custom_call.1} parent=1 // pred_region
      _
    $region9: #{tpu_custom_call.1} parent=1 // pred_fallthru
      _
    // Predicated region
    $region10: #{tpu_custom_call.1} parent=1 // pred_check
      _
    $region11: #{tpu_custom_call.1} parent=1 // pred_check_branch
      %20 = sbr.rel (0) target = $region13
    $region12: #{tpu_custom_call.1} parent=1 // pred_region
      _
    $region13: #{tpu_custom_call.1} parent=1 // pred_fallthru
      _
    // Predicated region
    $region14: #{tpu_custom_call.1} parent=1 // pred_check
      _
    $region15: #{tpu_custom_call.1} parent=1 // pred_check_branch
      %22 = sbr.rel (0) target = $region17
    $region16: #{tpu_custom_call.1} parent=1 // pred_region
      _
    $region17: #{tpu_custom_call.1} parent=1 // pred_fallthru
      _
    // Predicated region
    $region18: #{tpu_custom_call.1} parent=1 // pred_check
      _
    $region19: #{tpu_custom_call.1} parent=1 // pred_check_branch
      %24 = sbr.rel (0) target = $region21
    $region20: #{tpu_custom_call.1} parent=1 // pred_region
      _
    $region21: #{tpu_custom_call.1} parent=1 // pred_fallthru
      _
    // Predicated region
    $region22: #{tpu_custom_call.1} parent=1 // pred_check
      _
    $region23: #{tpu_custom_call.1} parent=1 // pred_check_branch
      %26 = sbr.rel (0) target = $region25
    $region24: #{tpu_custom_call.1} parent=1 // pred_region
      _
    $region25: #{tpu_custom_call.1} parent=1 // pred_fallthru
      _
    // Predicated region
    $region26: #{tpu_custom_call.1} parent=1 // pred_check
      _
    $region27: #{tpu_custom_call.1} parent=1 // pred_check_branch
      %28 = sbr.rel (0) target = $region29
    $region28: #{tpu_custom_call.1} parent=1 // pred_region
      _
    $region29: #{tpu_custom_call.1} parent=1 // pred_fallthru
      _
    // Predicated region
    $region30: #{tpu_custom_call.1} parent=1 // pred_check
      _
    $region31: #{tpu_custom_call.1} parent=1 // pred_check_branch
      %30 = sbr.rel (0) target = $region33
    $region32: #{tpu_custom_call.1} parent=1 // pred_region
      _
    $region33: #{tpu_custom_call.1} parent=1 // pred_fallthru
      _
    // Predicated region
    $region34: #{tpu_custom_call.1} parent=1 // pred_check
      _
    $region35: #{tpu_custom_call.1} parent=1 // pred_check_branch
      %32 = sbr.rel (0) target = $region37
    $region36: #{tpu_custom_call.1} parent=1 // pred_region
      _
    $region37: #{tpu_custom_call.1} parent=1 // pred_fallthru
      _
    %v33 = vld [vmem:[%s0] sm:$0xff]
    %v34 = vld [vmem:[%s0 + $0x8] sm:$0xff]
    %v35 = vld [vmem:[%s0 + $0x10] sm:$0xff]
    %v36 = vld [vmem:[%s0 + $0x18] sm:$0xff]
    %v37 = vld [vmem:[%s0 + $0x20] sm:$0xff]
    %v38 = vld [vmem:[%s0 + $0x28] sm:$0xff]
    %v39 = vld [vmem:[%s0 + $0x30] sm:$0xff]
    %v40 = vld [vmem:[%s0 + $0x38] sm:$0xff]
    %v41 = vld [vmem:[%s3] sm:$0xff]
    %v42 = vld [vmem:[%s3 + $0x8] sm:$0xff]
    %v43 = vld [vmem:[%s3 + $0x10] sm:$0xff]
    %v44 = vld [vmem:[%s3 + $0x18] sm:$0xff]
    %v45 = vld [vmem:[%s3 + $0x20] sm:$0xff]
    %v46 = vld [vmem:[%s3 + $0x28] sm:$0xff]
    %vm47 = vcmask 392192
    %v49 = vsel %vm47, %v33, 0
    %v52 = vsel %vm47, %v34, 0
    %v55 = vsel %vm47, %v35, 0
    %v58 = vsel %vm47, %v36, 0
    %v61 = vsel %vm47, %v37, 0
    %v64 = vsel %vm47, %v38, 0
    %v67 = vsel %vm47, %v39, 0
    %v70 = vsel %vm47, %v40, 0
    %72 = vmatprep.subr.mxu0 0.0
    %73 = vmatpush1.msra.mxu0 %v41
    %74 = vmatprep.subr.mxu0 0.0
    %75 = vmatpush1.msra.mxu0 %v42
    %76 = vmatprep.subr.mxu0 0.0
    %77 = vmatpush1.msra.mxu0 %v43
    %78 = vmatprep.subr.mxu0 0.0
    %79 = vmatpush1.msra.mxu0 %v44
    %80 = vmatprep.subr.mxu0 0.0
    %81 = vmatpush1.msra.mxu0 %v45
    %82 = vmatprep.subr.mxu0 0.0
    %83 = vmatpush1.msra.mxu0 %v46
    %84 = vmatprep.subr.mxu0 0.0
    %85 = vmatpush1.msra.mxu0 0.0
    %86 = vmatprep.subr.mxu0 0.0
    %87 = vmatpush1.msra.mxu0 0.0
    %88 = vmatprep.subr.mxu0 0.0
    %89 = vmatpush1.msra.mxu0 0.0
    %90 = vmatprep.subr.mxu0 0.0
    %91 = vmatpush1.msra.mxu0 0.0
    %92 = vmatprep.subr.mxu0 0.0
    %93 = vmatpush1.msra.mxu0 0.0
    %94 = vmatprep.subr.mxu0 0.0
    %95 = vmatpush1.msra.mxu0 0.0
    %96 = vmatprep.subr.mxu0 0.0
    %97 = vmatpush1.msra.mxu0 0.0
    %98 = vmatprep.subr.mxu0 0.0
    %99 = vmatpush1.msra.mxu0 0.0
    %100 = vmatprep.subr.mxu0 0.0
    %101 = vmatpush1.msra.mxu0 0.0
    %102 = vmatprep.subr.mxu0 0.0
    %103 = vmatpush1.msra.mxu0 0.0
    %104 = vmatprep.subr.mxu0 0.0
    %105 = vmatpush1.msra.mxu0 0.0
    %106 = vmatprep.subr.mxu0 0.0
    %107 = vmatpush1.msra.mxu0 0.0
    %108 = vmatprep.subr.mxu0 0.0
    %109 = vmatpush1.msra.mxu0 0.0
    %110 = vmatprep.subr.mxu0 0.0
    %111 = vmatpush1.msra.mxu0 0.0
    %112 = vmatprep.subr.mxu0 0.0
    %113 = vmatpush1.msra.mxu0 0.0
    %114 = vmatprep.subr.mxu0 0.0
    %115 = vmatpush1.msra.mxu0 0.0
    %116 = vmatprep.subr.mxu0 0.0
    %117 = vmatpush1.msra.mxu0 0.0
    %118 = vmatprep.subr.mxu0 0.0
    %119 = vmatpush1.msra.mxu0 0.0
    %120 = vmatprep.subr.mxu0 0.0
    %121 = vmatpush1.msra.mxu0 0.0
    %122 = vmatprep.subr.mxu0 0.0
    %123 = vmatpush1.msra.mxu0 0.0
    %124 = vmatprep.subr.mxu0 0.0
    %125 = vmatpush1.msra.mxu0 0.0
    %126 = vmatprep.subr.mxu0 0.0
    %127 = vmatpush1.msra.mxu0 0.0
    %128 = vmatprep.subr.mxu0 0.0
    %129 = vmatpush1.msra.mxu0 0.0
    %130 = vmatprep.subr.mxu0 0.0
    %131 = vmatpush1.msra.mxu0 0.0
    %132 = vmatprep.subr.mxu0 0.0
    %133 = vmatpush1.msra.mxu0 0.0
    %134 = vmatprep.subr.mxu0 0.0
    %135 = vmatpush1.msra.mxu0 0.0
    %136 = vmatprep.mubr.f32.mxu0 0.0
    %137 = vmatmul.mubr.f32.gmra.mrb[0].mxu0 %v49
    %v138 = vpop.f32.mrb[0].mxu0
    %v139 = vadd.f32 0.0, %v138
    %v140 = vpop.f32.mrb[0].mxu0
    %141 = vmatprep.mubr.f32.mxu0 0.0
    %142 = vmatmul.mubr.f32.gmra.mrb[0].mxu0 %v52
    %v143 = vpop.f32.mrb[0].mxu0
    %v144 = vadd.f32 0.0, %v143
    %v145 = vpop.f32.mrb[0].mxu0
    %146 = vmatprep.mubr.f32.mxu0 0.0
    %147 = vmatmul.mubr.f32.gmra.mrb[0].mxu0 %v55
    %v148 = vpop.f32.mrb[0].mxu0
    %v149 = vadd.f32 0.0, %v148
    %v150 = vpop.f32.mrb[0].mxu0
    %151 = vmatprep.mubr.f32.mxu0 0.0
    %152 = vmatmul.mubr.f32.gmra.mrb[0].mxu0 %v58
    %v153 = vpop.f32.mrb[0].mxu0
    %v154 = vadd.f32 0.0, %v153
    %v155 = vpop.f32.mrb[0].mxu0
    %156 = vmatprep.mubr.f32.mxu0 0.0
    %157 = vmatmul.mubr.f32.gmra.mrb[0].mxu0 %v61
    %v158 = vpop.f32.mrb[0].mxu0
    %v159 = vadd.f32 0.0, %v158
    %v160 = vpop.f32.mrb[0].mxu0
    %161 = vmatprep.mubr.f32.mxu0 0.0
    %162 = vmatmul.mubr.f32.gmra.mrb[0].mxu0 %v64
    %v163 = vpop.f32.mrb[0].mxu0
    %v164 = vadd.f32 0.0, %v163
    %v165 = vpop.f32.mrb[0].mxu0
    %166 = vmatprep.mubr.f32.mxu0 0.0
    %167 = vmatmul.mubr.f32.gmra.mrb[0].mxu0 %v67
    %v168 = vpop.f32.mrb[0].mxu0
    %v169 = vadd.f32 0.0, %v168
    %v170 = vpop.f32.mrb[0].mxu0
    %171 = vmatprep.mubr.f32.mxu0 0.0
    %172 = vmatmul.mubr.f32.gmra.mrb[0].mxu0 %v70
    %v173 = vpop.f32.mrb[0].mxu0
    %v174 = vadd.f32 0.0, %v173
    %v175 = vpop.f32.mrb[0].mxu0
    %176 = vdwg.mxu0
    %v177 = vld [vmem:[%s1] sm:$0xff]
    %v178 = vld [vmem:[%s1 + $0x8] sm:$0xff]
    %v179 = vld [vmem:[%s1 + $0x10] sm:$0xff]
    %v180 = vld [vmem:[%s1 + $0x18] sm:$0xff]
    %v181 = vld [vmem:[%s1 + $0x20] sm:$0xff]
    %v182 = vld [vmem:[%s1 + $0x28] sm:$0xff]
    %v183 = vld [vmem:[%s1 + $0x30] sm:$0xff]
    %v184 = vld [vmem:[%s1 + $0x38] sm:$0xff]
    %193 = vrot.lane.b32.xlu0 %v139, 120
    %v194 = vpop.permute.xlu0 %193
    %195 = vrot.lane.b32.xlu0 %v144, 120
    %v196 = vpop.permute.xlu0 %195
    %197 = vrot.lane.b32.xlu0 %v149, 120
    %v198 = vpop.permute.xlu0 %197
    %199 = vrot.lane.b32.xlu0 %v154, 120
    %v200 = vpop.permute.xlu0 %199
    %201 = vrot.lane.b32.xlu0 %v159, 120
    %v202 = vpop.permute.xlu0 %201
    %203 = vrot.lane.b32.xlu0 %v164, 120
    %v204 = vpop.permute.xlu0 %203
    %205 = vrot.lane.b32.xlu0 %v169, 120
    %v206 = vpop.permute.xlu0 %205
    %207 = vrot.lane.b32.xlu0 %v174, 120
    %v208 = vpop.permute.xlu0 %207
    %vm209 = vcmask 64512
    %v210 = vsel %vm209, %v139, 0
    %v212 = vsel %vm209, %v144, 0
    %v214 = vsel %vm209, %v149, 0
    %v216 = vsel %vm209, %v154, 0
    %v218 = vsel %vm209, %v159, 0
    %v220 = vsel %vm209, %v164, 0
    %v222 = vsel %vm209, %v169, 0
    %v224 = vsel %vm209, %v174, 0
    %v226 = vsel %vm209, %v194, 0
    %v228 = vsel %vm209, %v196, 0
    %v230 = vsel %vm209, %v198, 0
    %v232 = vsel %vm209, %v200, 0
    %v234 = vsel %vm209, %v202, 0
    %v236 = vsel %vm209, %v204, 0
    %v238 = vsel %vm209, %v206, 0
    %v240 = vsel %vm209, %v208, 0
    %242 = vmatprep.subr.mxu0 0.0
    %243 = vmatpush1.xpose.msra.mxu0 %v226
    %244 = vmatprep.subr.mxu0 0.0
    %245 = vmatpush1.xpose.msra.mxu0 %v228
    %246 = vmatprep.subr.mxu0 0.0
    %247 = vmatpush1.xpose.msra.mxu0 %v230
    %248 = vmatprep.subr.mxu0 0.0
    %249 = vmatpush1.xpose.msra.mxu0 %v232
    %250 = vmatprep.subr.mxu0 0.0
    %251 = vmatpush1.xpose.msra.mxu0 %v234
    %252 = vmatprep.subr.mxu0 0.0
    %253 = vmatpush1.xpose.msra.mxu0 %v236
    %254 = vmatprep.subr.mxu0 0.0
    %255 = vmatpush1.xpose.msra.mxu0 %v238
    %256 = vmatprep.subr.mxu0 0.0
    %257 = vmatpush1.xpose.msra.mxu0 %v240
    %258 = vmatprep.subr.mxu0 0.0
    %259 = vmatpush1.xpose.msra.mxu0 0.0
    %260 = vmatprep.subr.mxu0 0.0
    %261 = vmatpush1.xpose.msra.mxu0 0.0
    %262 = vmatprep.subr.mxu0 0.0
    %263 = vmatpush1.xpose.msra.mxu0 0.0
    %264 = vmatprep.subr.mxu0 0.0
    %265 = vmatpush1.xpose.msra.mxu0 0.0
    %266 = vmatprep.subr.mxu0 0.0
    %267 = vmatpush1.xpose.msra.mxu0 0.0
    %268 = vmatprep.subr.mxu0 0.0
    %269 = vmatpush1.xpose.msra.mxu0 0.0
    %270 = vmatprep.subr.mxu0 0.0
    %271 = vmatpush1.xpose.msra.mxu0 0.0
    %272 = vmatprep.subr.mxu0 0.0
    %273 = vmatpush1.xpose.msra.mxu0 0.0
    %274 = vmatprep.subr.mxu0 0.0
    %275 = vmatpush1.xpose.msra.mxu0 0.0
    %276 = vmatprep.subr.mxu0 0.0
    %277 = vmatpush1.xpose.msra.mxu0 0.0
    %278 = vmatprep.subr.mxu0 0.0
    %279 = vmatpush1.xpose.msra.mxu0 0.0
    %280 = vmatprep.subr.mxu0 0.0
    %281 = vmatpush1.xpose.msra.mxu0 0.0
    %282 = vmatprep.subr.mxu0 0.0
    %283 = vmatpush1.xpose.msra.mxu0 0.0
    %284 = vmatprep.subr.mxu0 0.0
    %285 = vmatpush1.xpose.msra.mxu0 0.0
    %286 = vmatprep.subr.mxu0 0.0
    %287 = vmatpush1.xpose.msra.mxu0 0.0
    %288 = vmatprep.subr.mxu0 0.0
    %289 = vmatpush1.xpose.msra.mxu0 0.0
    %290 = vmatprep.subr.mxu0 0.0
    %291 = vmatpush1.xpose.msra.mxu0 0.0
    %292 = vmatprep.subr.mxu0 0.0
    %293 = vmatpush1.xpose.msra.mxu0 0.0
    %294 = vmatprep.subr.mxu0 0.0
    %295 = vmatpush1.xpose.msra.mxu0 0.0
    %296 = vmatprep.subr.mxu0 0.0
    %297 = vmatpush1.xpose.msra.mxu0 0.0
    %298 = vmatprep.subr.mxu0 0.0
    %299 = vmatpush1.xpose.msra.mxu0 0.0
    %300 = vmatprep.subr.mxu0 0.0
    %301 = vmatpush1.xpose.msra.mxu0 0.0
    %302 = vmatprep.subr.mxu0 0.0
    %303 = vmatpush1.xpose.msra.mxu0 0.0
    %304 = vmatprep.subr.mxu0 0.0
    %305 = vmatpush1.xpose.msra.mxu0 0.0
    %306 = vmatprep.mubr.f32.mxu0 0.0
    %307 = vmatmul.mubr.f32.gmra.mrb[0].mxu0 %v210
    %v308 = vpop.f32.mrb[0].mxu0
    %v309 = vadd.f32 %v177, %v308
    %v310 = vpop.f32.mrb[0].mxu0
    %311 = vmatprep.mubr.f32.mxu0 0.0
    %312 = vmatmul.mubr.f32.gmra.mrb[0].mxu0 %v212
    %v313 = vpop.f32.mrb[0].mxu0
    %v314 = vadd.f32 %v178, %v313
    %v315 = vpop.f32.mrb[0].mxu0
    %316 = vmatprep.mubr.f32.mxu0 0.0
    %317 = vmatmul.mubr.f32.gmra.mrb[0].mxu0 %v214
    %v318 = vpop.f32.mrb[0].mxu0
    %v319 = vadd.f32 %v179, %v318
    %v320 = vpop.f32.mrb[0].mxu0
    %321 = vmatprep.mubr.f32.mxu0 0.0
    %322 = vmatmul.mubr.f32.gmra.mrb[0].mxu0 %v216
    %v323 = vpop.f32.mrb[0].mxu0
    %v324 = vadd.f32 %v180, %v323
    %v325 = vpop.f32.mrb[0].mxu0
    %326 = vmatprep.mubr.f32.mxu0 0.0
    %327 = vmatmul.mubr.f32.gmra.mrb[0].mxu0 %v218
    %v328 = vpop.f32.mrb[0].mxu0
    %v329 = vadd.f32 %v181, %v328
    %v330 = vpop.f32.mrb[0].mxu0
    %331 = vmatprep.mubr.f32.mxu0 0.0
    %332 = vmatmul.mubr.f32.gmra.mrb[0].mxu0 %v220
    %v333 = vpop.f32.mrb[0].mxu0
    %v334 = vadd.f32 %v182, %v333
    %v335 = vpop.f32.mrb[0].mxu0
    %336 = vmatprep.mubr.f32.mxu0 0.0
    %337 = vmatmul.mubr.f32.gmra.mrb[0].mxu0 %v222
    %v338 = vpop.f32.mrb[0].mxu0
    %v339 = vadd.f32 %v183, %v338
    %v340 = vpop.f32.mrb[0].mxu0
    %341 = vmatprep.mubr.f32.mxu0 0.0
    %342 = vmatmul.mubr.f32.gmra.mrb[0].mxu0 %v224
    %v343 = vpop.f32.mrb[0].mxu0
    %v344 = vadd.f32 %v184, %v343
    %v345 = vpop.f32.mrb[0].mxu0
    %346 = vdwg.mxu0
    %vm347 = vcmask 523264
    %v348 = vsel %vm347, %v309, -inf
    %349 = vmax.xlane.f32.xlu0 %v348
    %v350 = vpop.xlane.xlu0 %349
    %v351 = vsel %vm347, %v314, -inf
    %352 = vmax.xlane.f32.xlu0 %v351
    %v353 = vpop.xlane.xlu0 %352
    %v354 = vsel %vm347, %v319, -inf
    %355 = vmax.xlane.f32.xlu0 %v354
    %v356 = vpop.xlane.xlu0 %355
    %v357 = vsel %vm347, %v324, -inf
    %358 = vmax.xlane.f32.xlu0 %v357
    %v359 = vpop.xlane.xlu0 %358
    %v360 = vsel %vm347, %v329, -inf
    %361 = vmax.xlane.f32.xlu0 %v360
    %v362 = vpop.xlane.xlu0 %361
    %v363 = vsel %vm347, %v334, -inf
    %364 = vmax.xlane.f32.xlu0 %v363
    %v365 = vpop.xlane.xlu0 %364
    %v366 = vsel %vm347, %v339, -inf
    %367 = vmax.xlane.f32.xlu0 %v366
    %v368 = vpop.xlane.xlu0 %367
    %v369 = vsel %vm347, %v344, -inf
    %370 = vmax.xlane.f32.xlu0 %v369
    %v371 = vpop.xlane.xlu0 %370
    %v372 = vsub.f32 %v309, %v350
    %v373 = vsub.f32 %v314, %v353
    %v374 = vsub.f32 %v319, %v356
    %v375 = vsub.f32 %v324, %v359
    %v376 = vsub.f32 %v329, %v362
    %v377 = vsub.f32 %v334, %v365
    %v378 = vsub.f32 %v339, %v368
    %v379 = vsub.f32 %v344, %v371
    %v380 = vmul.f32 %v372, 1.442695
    %v381 = vpow.pop %v380
    %v382 = vmul.f32 %v373, 1.442695
    %v383 = vpow.pop %v382
    %v384 = vmul.f32 %v374, 1.442695
    %v385 = vpow.pop %v384
    %v386 = vmul.f32 %v375, 1.442695
    %v387 = vpow.pop %v386
    %v388 = vmul.f32 %v376, 1.442695
    %v389 = vpow.pop %v388
    %v390 = vmul.f32 %v377, 1.442695
    %v391 = vpow.pop %v390
    %v392 = vmul.f32 %v378, 1.442695
    %v393 = vpow.pop %v392
    %v394 = vmul.f32 %v379, 1.442695
    %v395 = vpow.pop %v394
    %v396 = vsel %vm347, %v381, 0.0
    %397 = vadd.xlane.f32.xlu0 %v396
    %v398 = vpop.xlane.xlu0 %397
    %v399 = vsel %vm347, %v383, 0.0
    %400 = vadd.xlane.f32.xlu0 %v399
    %v401 = vpop.xlane.xlu0 %400
    %v402 = vsel %vm347, %v385, 0.0
    %403 = vadd.xlane.f32.xlu0 %v402
    %v404 = vpop.xlane.xlu0 %403
    %v405 = vsel %vm347, %v387, 0.0
    %406 = vadd.xlane.f32.xlu0 %v405
    %v407 = vpop.xlane.xlu0 %406
    %v408 = vsel %vm347, %v389, 0.0
    %409 = vadd.xlane.f32.xlu0 %v408
    %v410 = vpop.xlane.xlu0 %409
    %v411 = vsel %vm347, %v391, 0.0
    %412 = vadd.xlane.f32.xlu0 %v411
    %v413 = vpop.xlane.xlu0 %412
    %v414 = vsel %vm347, %v393, 0.0
    %415 = vadd.xlane.f32.xlu0 %v414
    %v416 = vpop.xlane.xlu0 %415
    %v417 = vsel %vm347, %v395, 0.0
    %418 = vadd.xlane.f32.xlu0 %v417
    %v419 = vpop.xlane.xlu0 %418
    %v420 = vrcp.pop %v398
    %v421 = vrcp.pop %v401
    %v422 = vrcp.pop %v404
    %v423 = vrcp.pop %v407
    %v424 = vrcp.pop %v410
    %v425 = vrcp.pop %v413
    %v426 = vrcp.pop %v416
    %v427 = vrcp.pop %v419
    %v428 = vmul.f32 %v381, %v420
    %v429 = vmul.f32 %v383, %v421
    %v430 = vmul.f32 %v385, %v422
    %v431 = vmul.f32 %v387, %v423
    %v432 = vmul.f32 %v389, %v424
    %v433 = vmul.f32 %v391, %v425
    %v434 = vmul.f32 %v393, %v426
    %v435 = vmul.f32 %v395, %v427
    %436 = vrot.lane.b32.xlu0 %v139, 112
    %v437 = vpop.permute.xlu0 %436
    %438 = vrot.lane.b32.xlu0 %v144, 112
    %v439 = vpop.permute.xlu0 %438
    %440 = vrot.lane.b32.xlu0 %v149, 112
    %v441 = vpop.permute.xlu0 %440
    %442 = vrot.lane.b32.xlu0 %v154, 112
    %v443 = vpop.permute.xlu0 %442
    %444 = vrot.lane.b32.xlu0 %v159, 112
    %v445 = vpop.permute.xlu0 %444
    %446 = vrot.lane.b32.xlu0 %v164, 112
    %v447 = vpop.permute.xlu0 %446
    %448 = vrot.lane.b32.xlu0 %v169, 112
    %v449 = vpop.permute.xlu0 %448
    %450 = vrot.lane.b32.xlu0 %v174, 112
    %v451 = vpop.permute.xlu0 %450
    %v461 = vsel %vm347, %v428, 0
    %v464 = vsel %vm347, %v429, 0
    %v467 = vsel %vm347, %v430, 0
    %v470 = vsel %vm347, %v431, 0
    %v473 = vsel %vm347, %v432, 0
    %v476 = vsel %vm347, %v433, 0
    %v479 = vsel %vm347, %v434, 0
    %v482 = vsel %vm347, %v435, 0
    %484 = vmatprep.subr.mxu0 0.0
    %485 = vmatpush1.msra.mxu0 %v437
    %486 = vmatprep.subr.mxu0 0.0
    %487 = vmatpush1.msra.mxu0 %v439
    %488 = vmatprep.subr.mxu0 0.0
    %489 = vmatpush1.msra.mxu0 %v441
    %490 = vmatprep.subr.mxu0 0.0
    %491 = vmatpush1.msra.mxu0 %v443
    %492 = vmatprep.subr.mxu0 0.0
    %493 = vmatpush1.msra.mxu0 %v445
    %494 = vmatprep.subr.mxu0 0.0
    %495 = vmatpush1.msra.mxu0 %v447
    %496 = vmatprep.subr.mxu0 0.0
    %497 = vmatpush1.msra.mxu0 %v449
    %498 = vmatprep.subr.mxu0 0.0
    %499 = vmatpush1.msra.mxu0 %v451
    %500 = vmatprep.subr.mxu0 0.0
    %501 = vmatpush1.msra.mxu0 0.0
    %502 = vmatprep.subr.mxu0 0.0
    %503 = vmatpush1.msra.mxu0 0.0
    %504 = vmatprep.subr.mxu0 0.0
    %505 = vmatpush1.msra.mxu0 0.0
    %506 = vmatprep.subr.mxu0 0.0
    %507 = vmatpush1.msra.mxu0 0.0
    %508 = vmatprep.subr.mxu0 0.0
    %509 = vmatpush1.msra.mxu0 0.0
    %510 = vmatprep.subr.mxu0 0.0
    %511 = vmatpush1.msra.mxu0 0.0
    %512 = vmatprep.subr.mxu0 0.0
    %513 = vmatpush1.msra.mxu0 0.0
    %514 = vmatprep.subr.mxu0 0.0
    %515 = vmatpush1.msra.mxu0 0.0
    %516 = vmatprep.subr.mxu0 0.0
    %517 = vmatpush1.msra.mxu0 0.0
    %518 = vmatprep.subr.mxu0 0.0
    %519 = vmatpush1.msra.mxu0 0.0
    %520 = vmatprep.subr.mxu0 0.0
    %521 = vmatpush1.msra.mxu0 0.0
    %522 = vmatprep.subr.mxu0 0.0
    %523 = vmatpush1.msra.mxu0 0.0
    %524 = vmatprep.subr.mxu0 0.0
    %525 = vmatpush1.msra.mxu0 0.0
    %526 = vmatprep.subr.mxu0 0.0
    %527 = vmatpush1.msra.mxu0 0.0
    %528 = vmatprep.subr.mxu0 0.0
    %529 = vmatpush1.msra.mxu0 0.0
    %530 = vmatprep.subr.mxu0 0.0
    %531 = vmatpush1.msra.mxu0 0.0
    %532 = vmatprep.subr.mxu0 0.0
    %533 = vmatpush1.msra.mxu0 0.0
    %534 = vmatprep.subr.mxu0 0.0
    %535 = vmatpush1.msra.mxu0 0.0
    %536 = vmatprep.subr.mxu0 0.0
    %537 = vmatpush1.msra.mxu0 0.0
    %538 = vmatprep.subr.mxu0 0.0
    %539 = vmatpush1.msra.mxu0 0.0
    %540 = vmatprep.subr.mxu0 0.0
    %541 = vmatpush1.msra.mxu0 0.0
    %542 = vmatprep.subr.mxu0 0.0
    %543 = vmatpush1.msra.mxu0 0.0
    %544 = vmatprep.subr.mxu0 0.0
    %545 = vmatpush1.msra.mxu0 0.0
    %546 = vmatprep.subr.mxu0 0.0
    %547 = vmatpush1.msra.mxu0 0.0
    %548 = vmatprep.mubr.f32.mxu0 0.0
    %549 = vmatmul.mubr.f32.gmra.mrb[0].mxu0 %v461
    %v550 = vpop.f32.mrb[0].mxu0
    %v551 = vadd.f32 0.0, %v550
    %v552 = vpop.f32.mrb[0].mxu0
    %553 = vmatprep.mubr.f32.mxu0 0.0
    %554 = vmatmul.mubr.f32.gmra.mrb[0].mxu0 %v464
    %v555 = vpop.f32.mrb[0].mxu0
    %v556 = vadd.f32 0.0, %v555
    %v557 = vpop.f32.mrb[0].mxu0
    %558 = vmatprep.mubr.f32.mxu0 0.0
    %559 = vmatmul.mubr.f32.gmra.mrb[0].mxu0 %v467
    %v560 = vpop.f32.mrb[0].mxu0
    %v561 = vadd.f32 0.0, %v560
    %v562 = vpop.f32.mrb[0].mxu0
    %563 = vmatprep.mubr.f32.mxu0 0.0
    %564 = vmatmul.mubr.f32.gmra.mrb[0].mxu0 %v470
    %v565 = vpop.f32.mrb[0].mxu0
    %v566 = vadd.f32 0.0, %v565
    %v567 = vpop.f32.mrb[0].mxu0
    %568 = vmatprep.mubr.f32.mxu0 0.0
    %569 = vmatmul.mubr.f32.gmra.mrb[0].mxu0 %v473
    %v570 = vpop.f32.mrb[0].mxu0
    %v571 = vadd.f32 0.0, %v570
    %v572 = vpop.f32.mrb[0].mxu0
    %573 = vmatprep.mubr.f32.mxu0 0.0
    %574 = vmatmul.mubr.f32.gmra.mrb[0].mxu0 %v476
    %v575 = vpop.f32.mrb[0].mxu0
    %v576 = vadd.f32 0.0, %v575
    %v577 = vpop.f32.mrb[0].mxu0
    %578 = vmatprep.mubr.f32.mxu0 0.0
    %579 = vmatmul.mubr.f32.gmra.mrb[0].mxu0 %v479
    %v580 = vpop.f32.mrb[0].mxu0
    %v581 = vadd.f32 0.0, %v580
    %v582 = vpop.f32.mrb[0].mxu0
    %583 = vmatprep.mubr.f32.mxu0 0.0
    %584 = vmatmul.mubr.f32.gmra.mrb[0].mxu0 %v482
    %v585 = vpop.f32.mrb[0].mxu0
    %v586 = vadd.f32 0.0, %v585
    %v587 = vpop.f32.mrb[0].mxu0
    %588 = vdwg.mxu0
    %v589 = vadd.f32 %v551, %v561
    %v590 = vadd.f32 %v556, %v566
    %v591 = vadd.f32 %v589, %v571
    %v592 = vadd.f32 %v590, %v576
    %v593 = vadd.f32 %v591, %v581
    %v594 = vadd.f32 %v592, %v586
    %v595 = vld [vmem:[%s5] sm:$0xff]
    %v596 = vld [vmem:[%s4] sm:$0xff]
    %v597 = vld [vmem:[%s4 + $0x8] sm:$0xff]
    %v598 = vld [vmem:[%s4 + $0x10] sm:$0xff]
    %v599 = vld [vmem:[%s4 + $0x18] sm:$0xff]
    %v600 = vlaneseq
    %v601 = vshrl.u32 %v600, 7
    %v602 = vsub.s32 0, %v601
    %v603 = vrot.slane %v595, %v602
    %vm604 = vcmask 261120
    %v606 = vsel %vm604, %v593, 0
    %v609 = vsel %vm604, %v594, 0
    %611 = vmatprep.subr.mxu0 0.0
    %612 = vmatpush1.msra.mxu0 %v596
    %613 = vmatprep.subr.mxu0 0.0
    %614 = vmatpush1.msra.mxu0 %v597
    %615 = vmatprep.subr.mxu0 0.0
    %616 = vmatpush1.msra.mxu0 %v598
    %617 = vmatprep.subr.mxu0 0.0
    %618 = vmatpush1.msra.mxu0 %v599
    %619 = vmatprep.subr.mxu0 0.0
    %620 = vmatpush1.msra.mxu0 0.0
    %621 = vmatprep.subr.mxu0 0.0
    %622 = vmatpush1.msra.mxu0 0.0
    %623 = vmatprep.subr.mxu0 0.0
    %624 = vmatpush1.msra.mxu0 0.0
    %625 = vmatprep.subr.mxu0 0.0
    %626 = vmatpush1.msra.mxu0 0.0
    %627 = vmatprep.subr.mxu0 0.0
    %628 = vmatpush1.msra.mxu0 0.0
    %629 = vmatprep.subr.mxu0 0.0
    %630 = vmatpush1.msra.mxu0 0.0
    %631 = vmatprep.subr.mxu0 0.0
    %632 = vmatpush1.msra.mxu0 0.0
    %633 = vmatprep.subr.mxu0 0.0
    %634 = vmatpush1.msra.mxu0 0.0
    %635 = vmatprep.subr.mxu0 0.0
    %636 = vmatpush1.msra.mxu0 0.0
    %637 = vmatprep.subr.mxu0 0.0
    %638 = vmatpush1.msra.mxu0 0.0
    %639 = vmatprep.subr.mxu0 0.0
    %640 = vmatpush1.msra.mxu0 0.0
    %641 = vmatprep.subr.mxu0 0.0
    %642 = vmatpush1.msra.mxu0 0.0
    %643 = vmatprep.subr.mxu0 0.0
    %644 = vmatpush1.msra.mxu0 0.0
    %645 = vmatprep.subr.mxu0 0.0
    %646 = vmatpush1.msra.mxu0 0.0
    %647 = vmatprep.subr.mxu0 0.0
    %648 = vmatpush1.msra.mxu0 0.0
    %649 = vmatprep.subr.mxu0 0.0
    %650 = vmatpush1.msra.mxu0 0.0
    %651 = vmatprep.subr.mxu0 0.0
    %652 = vmatpush1.msra.mxu0 0.0
    %653 = vmatprep.subr.mxu0 0.0
    %654 = vmatpush1.msra.mxu0 0.0
    %655 = vmatprep.subr.mxu0 0.0
    %656 = vmatpush1.msra.mxu0 0.0
    %657 = vmatprep.subr.mxu0 0.0
    %658 = vmatpush1.msra.mxu0 0.0
    %659 = vmatprep.subr.mxu0 0.0
    %660 = vmatpush1.msra.mxu0 0.0
    %661 = vmatprep.subr.mxu0 0.0
    %662 = vmatpush1.msra.mxu0 0.0
    %663 = vmatprep.subr.mxu0 0.0
    %664 = vmatpush1.msra.mxu0 0.0
    %665 = vmatprep.subr.mxu0 0.0
    %666 = vmatpush1.msra.mxu0 0.0
    %667 = vmatprep.subr.mxu0 0.0
    %668 = vmatpush1.msra.mxu0 0.0
    %669 = vmatprep.subr.mxu0 0.0
    %670 = vmatpush1.msra.mxu0 0.0
    %671 = vmatprep.subr.mxu0 0.0
    %672 = vmatpush1.msra.mxu0 0.0
    %673 = vmatprep.subr.mxu0 0.0
    %674 = vmatpush1.msra.mxu0 0.0
    %675 = vmatprep.mubr.f32.mxu0 0.0
    %676 = vmatmul.mubr.f32.gmra.mrb[0].mxu0 %v606
    %v677 = vpop.f32.mrb[0].mxu0
    %v678 = vadd.f32 %v603, %v677
    %v679 = vpop.f32.mrb[0].mxu0
    %680 = vmatprep.mubr.f32.mxu0 0.0
    %681 = vmatmul.mubr.f32.gmra.mrb[0].mxu0 %v609
    %v682 = vpop.f32.mrb[0].mxu0
    %v683 = vadd.f32 %v603, %v682
    %v684 = vpop.f32.mrb[0].mxu0
    %685 = vdwg.mxu0
    %v686 = vld [vmem:[%s2] sm:$0xff]
    %v687 = vld [vmem:[%s2 + $0x8] sm:$0xff]
    %v688 = vadd.f32 %v678, %v686
    %v689 = vadd.f32 %v683, %v687
    %v690 = vsel %vm604, %v688, 0.0
    %691 = vadd.xlane.f32.xlu0 %v690
    %v692 = vpop.xlane.xlu0 %691
    %v693 = vsel %vm604, %v689, 0.0
    %694 = vadd.xlane.f32.xlu0 %v693
    %v695 = vpop.xlane.xlu0 %694
    %v696 = vrcp.pop 32.0
    %v697 = vmul.f32 %v692, %v696
    %v698 = vmul.f32 %v695, %v696
    %v699 = vsub.f32 %v688, %v697
    %v700 = vsub.f32 %v689, %v698
    %v701 = vmul.f32 %v699, %v699
    %v702 = vmul.f32 %v700, %v700
    %v703 = vsel %vm604, %v701, 0.0
    %704 = vadd.xlane.f32.xlu0 %v703
    %v705 = vpop.xlane.xlu0 %704
    %v706 = vsel %vm604, %v702, 0.0
    %707 = vadd.xlane.f32.xlu0 %v706
    %v708 = vpop.xlane.xlu0 %707
    %v709 = vmul.f32 %v705, %v696
    %v710 = vmul.f32 %v708, %v696
    %v711 = vadd.f32 %v709, 1e-05
    %v712 = vadd.f32 %v710, 1e-05
    %v713 = vrsqrt.pop %v711
    %v714 = vrsqrt.pop %v712
    %v715 = vmul.f32 %v699, %v713
    %v716 = vmul.f32 %v700, %v714
    %v717 = vlaneseq
    %v718 = vshrl.u32 %v717, 7
    %v719 = vsub.s32 1, %v718
    %v720 = vrot.slane %v595, %v719
    %v721 = vmul.f32 %v715, %v720
    %v722 = vmul.f32 %v716, %v720
    %v723 = vlaneseq
    %v724 = vshrl.u32 %v723, 7
    %v725 = vsub.s32 2, %v724
    %v726 = vrot.slane %v595, %v725
    %v727 = vadd.f32 %v721, %v726
    %v728 = vadd.f32 %v722, %v726
    %v729 = vld [vmem:[%s6] sm:$0xff]
    %v730 = vld [vmem:[%s6 + $0x8] sm:$0xff]
    %v731 = vld [vmem:[%s6 + $0x10] sm:$0xff]
    %v732 = vld [vmem:[%s6 + $0x18] sm:$0xff]
    %v733 = vld [vmem:[%s7] sm:$0x1]
    %v735 = vlaneseq
    %v736 = vshrl.u32 %v735, 7
    %v737 = vsub.s32 0, %v736
    %v738 = vrot.slane %v733, %v737
    %v741 = vsel %vm604, %v727, 0
    %v744 = vsel %vm604, %v728, 0
    %746 = vmatprep.subr.mxu0 0.0
    %747 = vmatpush1.msra.mxu0 %v729
    %748 = vmatprep.subr.mxu0 0.0
    %749 = vmatpush1.msra.mxu0 %v730
    %750 = vmatprep.subr.mxu0 0.0
    %751 = vmatpush1.msra.mxu0 %v731
    %752 = vmatprep.subr.mxu0 0.0
    %753 = vmatpush1.msra.mxu0 %v732
    %754 = vmatprep.subr.mxu0 0.0
    %755 = vmatpush1.msra.mxu0 0.0
    %756 = vmatprep.subr.mxu0 0.0
    %757 = vmatpush1.msra.mxu0 0.0
    %758 = vmatprep.subr.mxu0 0.0
    %759 = vmatpush1.msra.mxu0 0.0
    %760 = vmatprep.subr.mxu0 0.0
    %761 = vmatpush1.msra.mxu0 0.0
    %762 = vmatprep.subr.mxu0 0.0
    %763 = vmatpush1.msra.mxu0 0.0
    %764 = vmatprep.subr.mxu0 0.0
    %765 = vmatpush1.msra.mxu0 0.0
    %766 = vmatprep.subr.mxu0 0.0
    %767 = vmatpush1.msra.mxu0 0.0
    %768 = vmatprep.subr.mxu0 0.0
    %769 = vmatpush1.msra.mxu0 0.0
    %770 = vmatprep.subr.mxu0 0.0
    %771 = vmatpush1.msra.mxu0 0.0
    %772 = vmatprep.subr.mxu0 0.0
    %773 = vmatpush1.msra.mxu0 0.0
    %774 = vmatprep.subr.mxu0 0.0
    %775 = vmatpush1.msra.mxu0 0.0
    %776 = vmatprep.subr.mxu0 0.0
    %777 = vmatpush1.msra.mxu0 0.0
    %778 = vmatprep.subr.mxu0 0.0
    %779 = vmatpush1.msra.mxu0 0.0
    %780 = vmatprep.subr.mxu0 0.0
    %781 = vmatpush1.msra.mxu0 0.0
    %782 = vmatprep.subr.mxu0 0.0
    %783 = vmatpush1.msra.mxu0 0.0
    %784 = vmatprep.subr.mxu0 0.0
    %785 = vmatpush1.msra.mxu0 0.0
    %786 = vmatprep.subr.mxu0 0.0
    %787 = vmatpush1.msra.mxu0 0.0
    %788 = vmatprep.subr.mxu0 0.0
    %789 = vmatpush1.msra.mxu0 0.0
    %790 = vmatprep.subr.mxu0 0.0
    %791 = vmatpush1.msra.mxu0 0.0
    %792 = vmatprep.subr.mxu0 0.0
    %793 = vmatpush1.msra.mxu0 0.0
    %794 = vmatprep.subr.mxu0 0.0
    %795 = vmatpush1.msra.mxu0 0.0
    %796 = vmatprep.subr.mxu0 0.0
    %797 = vmatpush1.msra.mxu0 0.0
    %798 = vmatprep.subr.mxu0 0.0
    %799 = vmatpush1.msra.mxu0 0.0
    %800 = vmatprep.subr.mxu0 0.0
    %801 = vmatpush1.msra.mxu0 0.0
    %802 = vmatprep.subr.mxu0 0.0
    %803 = vmatpush1.msra.mxu0 0.0
    %804 = vmatprep.subr.mxu0 0.0
    %805 = vmatpush1.msra.mxu0 0.0
    %806 = vmatprep.subr.mxu0 0.0
    %807 = vmatpush1.msra.mxu0 0.0
    %808 = vmatprep.subr.mxu0 0.0
    %809 = vmatpush1.msra.mxu0 0.0
    %810 = vmatprep.mubr.f32.mxu0 0.0
    %811 = vmatmul.mubr.f32.gmra.mrb[0].mxu0 %v741
    %v812 = vpop.f32.mrb[0].mxu0
    %v813 = vadd.f32 %v738, %v812
    %v814 = vpop.f32.mrb[0].mxu0
    %815 = vmatprep.mubr.f32.mxu0 0.0
    %816 = vmatmul.mubr.f32.gmra.mrb[0].mxu0 %v744
    %v817 = vpop.f32.mrb[0].mxu0
    %v818 = vadd.f32 %v738, %v817
    %v819 = vpop.f32.mrb[0].mxu0
    %820 = vdwg.mxu0
    %v821 = vmax.f32 %v813, 0.0
    %v822 = vmax.f32 %v818, 0.0
    %v823 = vld [vmem:[%s8] sm:$0xff]
    %v824 = vld [vmem:[%s8 + $0x8] sm:$0xff]
    %v825 = vld [vmem:[%s8 + $0x10] sm:$0xff]
    %v826 = vld [vmem:[%s8 + $0x18] sm:$0xff]
    %v827 = vld [vmem:[%s8 + $0x20] sm:$0xff]
    %v828 = vld [vmem:[%s8 + $0x28] sm:$0xff]
    %v829 = vld [vmem:[%s8 + $0x30] sm:$0xff]
    %v830 = vld [vmem:[%s8 + $0x38] sm:$0xff]
    %v831 = vld [vmem:[%s8 + $0x40] sm:$0xff]
    %v832 = vld [vmem:[%s8 + $0x48] sm:$0xff]
    %v833 = vld [vmem:[%s8 + $0x50] sm:$0xff]
    %v834 = vld [vmem:[%s8 + $0x58] sm:$0xff]
    %v835 = vld [vmem:[%s8 + $0x60] sm:$0xff]
    %v836 = vld [vmem:[%s8 + $0x68] sm:$0xff]
    %v837 = vld [vmem:[%s8 + $0x70] sm:$0xff]
    %v838 = vld [vmem:[%s8 + $0x78] sm:$0xff]
    %v839 = vlaneseq
    %v840 = vshrl.u32 %v839, 7
    %v841 = vsub.s32 3, %v840
    %v842 = vrot.slane %v595, %v841
    %843 = vmatprep.subr.mxu0 0.0
    %844 = vmatpush1.msra.mxu0 %v823
    %845 = vmatprep.subr.mxu0 0.0
    %846 = vmatpush1.msra.mxu0 %v824
    %847 = vmatprep.subr.mxu0 0.0
    %848 = vmatpush1.msra.mxu0 %v825
    %849 = vmatprep.subr.mxu0 0.0
    %850 = vmatpush1.msra.mxu0 %v826
    %851 = vmatprep.subr.mxu0 0.0
    %852 = vmatpush1.msra.mxu0 %v827
    %853 = vmatprep.subr.mxu0 0.0
    %854 = vmatpush1.msra.mxu0 %v828
    %855 = vmatprep.subr.mxu0 0.0
    %856 = vmatpush1.msra.mxu0 %v829
    %857 = vmatprep.subr.mxu0 0.0
    %858 = vmatpush1.msra.mxu0 %v830
    %859 = vmatprep.subr.mxu0 0.0
    %860 = vmatpush1.msra.mxu0 %v831
    %861 = vmatprep.subr.mxu0 0.0
    %862 = vmatpush1.msra.mxu0 %v832
    %863 = vmatprep.subr.mxu0 0.0
    %864 = vmatpush1.msra.mxu0 %v833
    %865 = vmatprep.subr.mxu0 0.0
    %866 = vmatpush1.msra.mxu0 %v834
    %867 = vmatprep.subr.mxu0 0.0
    %868 = vmatpush1.msra.mxu0 %v835
    %869 = vmatprep.subr.mxu0 0.0
    %870 = vmatpush1.msra.mxu0 %v836
    %871 = vmatprep.subr.mxu0 0.0
    %872 = vmatpush1.msra.mxu0 %v837
    %873 = vmatprep.subr.mxu0 0.0
    %874 = vmatpush1.msra.mxu0 %v838
    %875 = vmatprep.subr.mxu0 0.0
    %876 = vmatpush1.msra.mxu0 0.0
    %877 = vmatprep.subr.mxu0 0.0
    %878 = vmatpush1.msra.mxu0 0.0
    %879 = vmatprep.subr.mxu0 0.0
    %880 = vmatpush1.msra.mxu0 0.0
    %881 = vmatprep.subr.mxu0 0.0
    %882 = vmatpush1.msra.mxu0 0.0
    %883 = vmatprep.subr.mxu0 0.0
    %884 = vmatpush1.msra.mxu0 0.0
    %885 = vmatprep.subr.mxu0 0.0
    %886 = vmatpush1.msra.mxu0 0.0
    %887 = vmatprep.subr.mxu0 0.0
    %888 = vmatpush1.msra.mxu0 0.0
    %889 = vmatprep.subr.mxu0 0.0
    %890 = vmatpush1.msra.mxu0 0.0
    %891 = vmatprep.subr.mxu0 0.0
    %892 = vmatpush1.msra.mxu0 0.0
    %893 = vmatprep.subr.mxu0 0.0
    %894 = vmatpush1.msra.mxu0 0.0
    %895 = vmatprep.subr.mxu0 0.0
    %896 = vmatpush1.msra.mxu0 0.0
    %897 = vmatprep.subr.mxu0 0.0
    %898 = vmatpush1.msra.mxu0 0.0
    %899 = vmatprep.subr.mxu0 0.0
    %900 = vmatpush1.msra.mxu0 0.0
    %901 = vmatprep.subr.mxu0 0.0
    %902 = vmatpush1.msra.mxu0 0.0
    %903 = vmatprep.subr.mxu0 0.0
    %904 = vmatpush1.msra.mxu0 0.0
    %905 = vmatprep.subr.mxu0 0.0
    %906 = vmatpush1.msra.mxu0 0.0
    %907 = vmatprep.mubr.f32.mxu0 0.0
    %908 = vmatmul.mubr.f32.gmra.mrb[0].mxu0 %v821
    %v909 = vpop.f32.mrb[0].mxu0
    %v910 = vadd.f32 %v842, %v909
    %v911 = vpop.f32.mrb[0].mxu0
    %912 = vmatprep.mubr.f32.mxu0 0.0
    %913 = vmatmul.mubr.f32.gmra.mrb[0].mxu0 %v822
    %v914 = vpop.f32.mrb[0].mxu0
    %v915 = vadd.f32 %v842, %v914
    %v916 = vpop.f32.mrb[0].mxu0
    %917 = vdwg.mxu0
    %v918 = vadd.f32 %v910, %v727
    %v919 = vadd.f32 %v915, %v728
    %v920 = vsel %vm604, %v918, 0.0
    %921 = vadd.xlane.f32.xlu0 %v920
    %v922 = vpop.xlane.xlu0 %921
    %v923 = vsel %vm604, %v919, 0.0
    %924 = vadd.xlane.f32.xlu0 %v923
    %v925 = vpop.xlane.xlu0 %924
    %v926 = vmul.f32 %v922, %v696
    %v927 = vmul.f32 %v925, %v696
    %v928 = vsub.f32 %v918, %v926
    %v929 = vsub.f32 %v919, %v927
    %v930 = vmul.f32 %v928, %v928
    %v931 = vmul.f32 %v929, %v929
    %v932 = vsel %vm604, %v930, 0.0
    %933 = vadd.xlane.f32.xlu0 %v932
    %v934 = vpop.xlane.xlu0 %933
    %v935 = vsel %vm604, %v931, 0.0
    %936 = vadd.xlane.f32.xlu0 %v935
    %v937 = vpop.xlane.xlu0 %936
    %v938 = vmul.f32 %v934, %v696
    %v939 = vmul.f32 %v937, %v696
    %v940 = vadd.f32 %v938, 1e-05
    %v941 = vadd.f32 %v939, 1e-05
    %v942 = vrsqrt.pop %v940
    %v943 = vrsqrt.pop %v941
    %v944 = vmul.f32 %v928, %v942
    %v945 = vmul.f32 %v929, %v943
    %v946 = vlaneseq
    %v947 = vshrl.u32 %v946, 7
    %v948 = vsub.s32 4, %v947
    %v949 = vrot.slane %v595, %v948
    %v950 = vmul.f32 %v944, %v949
    %v951 = vmul.f32 %v945, %v949
    %v952 = vlaneseq
    %v953 = vshrl.u32 %v952, 7
    %v954 = vsub.s32 5, %v953
    %v955 = vrot.slane %v595, %v954
    %v956 = vadd.f32 %v950, %v955
    %v957 = vadd.f32 %v951, %v955
    %958 = vst.msk [vmem:[#allocation2] sm:$0xff] %vm604, %v956
    %959 = vst.msk [vmem:[#allocation2 + $0x8] sm:$0xff] %vm604, %v957
    // Predicated region
    $region38: #{tpu_custom_call.1} parent=1 // pred_check
      _
    $region39: #{tpu_custom_call.1} parent=1 // pred_check_branch
      %961 = sbr.rel (0) target = $region41
    $region40: #{tpu_custom_call.1} parent=1 // pred_region
      %s963 = ssub.s32 256, 256
      %964 = vsyncadd [#allocation3], %s963
      %s965 = sshll.u32 [#allocation2], 4
      %s966 = int_to_ptr.vmem [resolvable:$true] %s965
      %971 = dma.vmem_to_hbm [thread:$0]  %s966, 256, %s9, [#allocation3], 128, 128, 8
    $region41: #{tpu_custom_call.1} parent=1 // pred_fallthru
      _
    // Predicated region
    $region42: #{tpu_custom_call.1} parent=1 // pred_check
      _
    $region43: #{tpu_custom_call.1} parent=1 // pred_check_branch
      %973 = sbr.rel (0) target = $region45
    $region44: #{tpu_custom_call.1} parent=1 // pred_region
      %974 = dma.done [#allocation3], 256
    $region45: #{tpu_custom_call.1} parent=1 // pred_fallthru
      _
    %975 = vsyncpa [#allocation3], 1

</llo_original>
